<compile_context>
chip_gen: v7x
topology: tpu7x:2x2x1
jax: 0.10.0
libtpu: 0.0.40
codegen_flags: <defaults>
</compile_context>

<pallas_src>
import functools
import math

import jax
import jax.numpy as jnp
from jax.experimental import pallas as pl
from jax.experimental.pallas import tpu as pltpu

_LANE = 128
_SUBLANE = 8
# Budget for ALL double-buffered pipeline blocks of one grid step (bytes).
# Safely below the scoped-VMEM defaults on v5e (16 MiB) / v6e / v7x (32 MiB).
_DEFAULT_VMEM_BLOCK_BUDGET = 12 * 1024 * 1024
_VMEM_LIMIT_BYTES = 32 * 1024 * 1024


def _round_up(x: int, m: int) -> int:
    return (x + m - 1) // m * m


def _lane_dense_group(backcast_size: int, forecast_size: int) -> int:
    """Smallest g such that g*backcast_size and g*forecast_size are multiples
    of the 128-lane width (=> unmasked full-lane stores)."""
    gb = _LANE // math.gcd(_LANE, backcast_size)
    gf = _LANE // math.gcd(_LANE, forecast_size)
    return gb * gf // math.gcd(gb, gf)  # lcm(gb, gf)


def _choose_tile_rows(rows: int, lane_widths, itemsize: int,
                      budget_bytes: int, min_grid_steps: int) -> int:
    """Rows per block: as large as the VMEM budget allows (lane-padding and
    double-buffering aware), a multiple of 8, and small enough that the grid
    keeps >= min_grid_steps steps (v7x megacore sharding) when rows permit."""
    if rows <= _SUBLANE:
        return rows  # block == full dim; always layout-legal, single step.
    padded_row_bytes = sum(_round_up(w, _LANE) for w in lane_widths) * itemsize
    tb = budget_bytes // (2 * padded_row_bytes)  # x2: double-buffered pipeline
    tb = max(_SUBLANE, (tb // _SUBLANE) * _SUBLANE)
    if min_grid_steps > 1 and rows >= 2 * _SUBLANE:
        # Keep at least `min_grid_steps` steps so the "parallel" axis can shard
        # across both TensorCores on v7x.
        tb = min(tb, max(_SUBLANE, _round_up(pl.cdiv(rows, min_grid_steps), _SUBLANE)))
    # Never let the block exceed the array extent (round rows down to 8).
    tb = min(tb, max(_SUBLANE, (rows // _SUBLANE) * _SUBLANE))
    return tb


def _split_kernel(theta_ref, back_ref, fore_ref, *, backcast_size, forecast_size):
    # Simple path: static slices directly on the Ref (two narrow loads feeding
    # the two stores; block last dims equal the full array dims).
    theta_dim = theta_ref.shape[-1]
    back_ref[...] = theta_ref[:, :backcast_size]
    fore_ref[...] = theta_ref[:, theta_dim - forecast_size:]


def _split_kernel_lane_dense(theta_ref, back_ref, fore_ref, *,
                             theta_dim, backcast_size, forecast_size, group):
    # Lane-dense path: one full-lane load, de-interleave `group` original rows
    # (folded into the lane dimension) with static slices + concatenate (XLU),
    # then write each output as a single full-lane unmasked store.
    x = theta_ref[...]  # (tb, group * theta_dim)
    back_ref[...] = jnp.concatenate(
        [x[:, j * theta_dim: j * theta_dim + backcast_size] for j in range(group)],
        axis=-1)
    fore_ref[...] = jnp.concatenate(
        [x[:, (j + 1) * theta_dim - forecast_size: (j + 1) * theta_dim]
         for j in range(group)],
        axis=-1)


def _call_split(theta2d, out_widths, kernel, tb, cost):
    rows, in_width = theta2d.shape
    grid = (pl.cdiv(rows, tb),)
    out_shape = tuple(jax.ShapeDtypeStruct((rows, w), theta2d.dtype)
                      for w in out_widths)
    return pl.pallas_call(
        kernel,
        out_shape=out_shape,
        grid=grid,
        in_specs=[pl.BlockSpec((tb, in_width), lambda i: (i, 0))],
        out_specs=tuple(pl.BlockSpec((tb, w), lambda i: (i, 0))
                        for w in out_widths),
        compiler_params=pltpu.CompilerParams(
            dimension_semantics=("parallel",),
            vmem_limit_bytes=_VMEM_LIMIT_BYTES),
        cost_estimate=cost,
    )(theta2d)


def generic_basis(theta: jax.Array, backcast_size: int, forecast_size: int, *,
                  vmem_block_budget_bytes: int = _DEFAULT_VMEM_BLOCK_BUDGET,
                  min_grid_steps: int = 2,
                  lane_dense: bool = True):
    """Pallas implementation of GenericBasis.forward.

    Args:
      theta: [batch, theta_dim], theta_dim >= max(backcast_size, forecast_size).
    Returns:
      (backcast [batch, backcast_size], forecast [batch, forecast_size])
    """
    batch, theta_dim = theta.shape
    assert theta_dim >= backcast_size >= 1
    assert theta_dim >= forecast_size >= 1

    itemsize = jnp.dtype(theta.dtype).itemsize
    bytes_accessed = itemsize * batch * (theta_dim + backcast_size + forecast_size)
    cost = pl.CostEstimate(flops=0, transcendentals=0,
                           bytes_accessed=bytes_accessed)

    g = _lane_dense_group(backcast_size, forecast_size)
    if lane_dense and g > 1 and batch > 0 and batch % g == 0:
        # Lane-dense path: fold g rows into the lane dimension (free reshape).
        rows = batch // g
        in_w = g * theta_dim
        out_ws = (g * backcast_size, g * forecast_size)
        tb = _choose_tile_rows(rows, (in_w,) + out_ws, itemsize,
                               vmem_block_budget_bytes, min_grid_steps)
        kernel = functools.partial(
            _split_kernel_lane_dense, theta_dim=theta_dim,
            backcast_size=backcast_size, forecast_size=forecast_size, group=g)
        back_f, fore_f = _call_split(theta.reshape(rows, in_w), out_ws,
                                     kernel, tb, cost)
        # Row-major reshapes back to [batch, ...] are free views.
        return (back_f.reshape(batch, backcast_size),
                fore_f.reshape(batch, forecast_size))

    # Simple path (also the remainder fallback when batch % g != 0).
    out_ws = (backcast_size, forecast_size)
    tb = _choose_tile_rows(batch, (theta_dim,) + out_ws, itemsize,
                           vmem_block_budget_bytes, min_grid_steps)
    kernel = functools.partial(_split_kernel, backcast_size=backcast_size,
                               forecast_size=forecast_size)
    return _call_split(theta, out_ws, kernel, tb, cost)


def _check(theta, backcast_size, forecast_size):
    back, fore = generic_basis(theta, backcast_size, forecast_size)
    jax.block_until_ready((back, fore))
    ref_back = theta[:, :backcast_size]
    ref_fore = theta[:, theta.shape[1] - forecast_size:]
    assert back.shape == ref_back.shape and fore.shape == ref_fore.shape
    assert jnp.array_equal(back, ref_back)
    assert jnp.array_equal(fore, ref_fore)


if __name__ == "__main__":
    # GenericBasis has no trainable parameters; only backcast/forecast sizes.
    key = jax.random.PRNGKey(0)
    k0, k1, k2, k3 = jax.random.split(key, 4)

    # 1) Small shape consistent with the module (simple path, grid=1).
    backcast_size, forecast_size, theta_dim, batch = 16, 8, 24, 4
    theta = jax.random.normal(k0, (batch, theta_dim), dtype=jnp.float32)
    _check(theta, backcast_size, forecast_size)

    # 2) Lane-dense folded path + VMEM-budget tiling + >=2 grid steps (v7x).
    theta_big = jax.random.normal(k1, (1088, 24), dtype=jnp.float32)
    _check(theta_big, 16, 8)

    # 3) Overlapping slices (b + f > theta_dim) + partial final batch block.
    theta_ovl = jax.random.normal(k2, (20, 24), dtype=jnp.float32)
    _check(theta_ovl, 16, 16)

    # 4) Lane-dense path with a gap (theta_dim > b + f).
    theta_gap = jax.random.normal(k3, (32, 40), dtype=jnp.float32)
    _check(theta_gap, 16, 8)

    print("KERNEL_OK")
</pallas_src>

<mosaic_0001>
module attributes {stable_mosaic.version = 11 : i64} {
  func.func @_split_kernel(%arg0: i32, %arg1: memref<4x24xf32, #tpu.memory_space<vmem>>, %arg2: memref<4x16xf32, #tpu.memory_space<vmem>>, %arg3: memref<4x8xf32, #tpu.memory_space<vmem>>) attributes {dimension_semantics = [#tpu.dimension_semantics<parallel>], iteration_bounds = array<i64: 1>, scalar_prefetch = 0 : i64, scratch_operands = 0 : i64, tpu.core_type = #tpu.core_type<tc>, window_params = [{transform_indices = @transform_0, window_bounds = array<i64: 4, 24>}, {transform_indices = @transform_1, window_bounds = array<i64: 4, 16>}, {transform_indices = @transform_2, window_bounds = array<i64: 4, 8>}]} {
    %c0 = arith.constant 0 : index
    %c0_0 = arith.constant 0 : index
    %0 = vector.load %arg1[%c0, %c0_0] : memref<4x24xf32, #tpu.memory_space<vmem>>, vector<4x16xf32>
    %c0_1 = arith.constant 0 : index
    %c0_2 = arith.constant 0 : index
    %1 = vector.load %arg2[%c0_1, %c0_2] : memref<4x16xf32, #tpu.memory_space<vmem>>, vector<4x16xf32>
    tpu.vector_store %arg2[%c0_1, %c0_2], %0 {strides = array<i32>} : memref<4x16xf32, #tpu.memory_space<vmem>>, vector<4x16xf32>,
    %c0_3 = arith.constant 0 : index
    %c16 = arith.constant 16 : index
    %2 = vector.load %arg1[%c0_3, %c16] : memref<4x24xf32, #tpu.memory_space<vmem>>, vector<4x8xf32>
    %c0_4 = arith.constant 0 : index
    %c0_5 = arith.constant 0 : index
    %3 = vector.load %arg3[%c0_4, %c0_5] : memref<4x8xf32, #tpu.memory_space<vmem>>, vector<4x8xf32>
    tpu.vector_store %arg3[%c0_4, %c0_5], %2 {strides = array<i32>} : memref<4x8xf32, #tpu.memory_space<vmem>>, vector<4x8xf32>,
    return
  }
  func.func @transform_0(%arg0: i32) -> (i32, i32) {
    %c0_i32 = arith.constant 0 : i32
    %c0_i32_0 = arith.constant 0 : i32
    return %arg0, %c0_i32 : i32, i32
  }
  func.func @transform_1(%arg0: i32) -> (i32, i32) {
    %c0_i32 = arith.constant 0 : i32
    %c0_i32_0 = arith.constant 0 : i32
    return %arg0, %c0_i32 : i32, i32
  }
  func.func @transform_2(%arg0: i32) -> (i32, i32) {
    %c0_i32 = arith.constant 0 : i32
    %c0_i32_0 = arith.constant 0 : i32
    return %arg0, %c0_i32 : i32, i32
  }
}

</mosaic_0001>

<llo_original>
// kernel: tpu_custom_call.1
$region0: #{tpu_custom_call.1}
  #allocation0 [shape = 'u32[]', space=smem, size = 0x4, offset = 0x4, fixed_abs, tag = 'smem constant byte address 0x4 - core index']
  #allocation1 [shape = 'u32[144,128]{1,0:T(1,128)}', space=vmem, size = 0x12000, scoped, tag = 'internal scratch']
  %s0 = inlined_call_operand.hbm [shape: f32[4,24], index: 0, kind: input, shape index: {}]
  %s1 = inlined_call_operand.hbm [shape: f32[4,16], index: 1, kind: output, shape index: {0}]
  %s2 = inlined_call_operand.hbm [shape: f32[4,8], index: 2, kind: output, shape index: {1}]
  %3 = xla_tuple %s1, %s2
  %s4 = sld [smem:[#allocation0]]
  $region26: #{tpu_custom_call.1} parent=0
    _
  %s6 = ssub.s32 1, %s4
  %s7 = scalar_select 0, %s6, %s4
  $region1: #{tpu_custom_call.1} parent=0
    #allocation2 [shape = 'u8[2048]{0}', space=vmem, size = 0x800, scoped, tag = 'input window, operand 0, single buffered']
    #allocation3 [shape = 's32[1]{0}', space=sflag, size = 0x4, scoped, tag = 'scoped memory for tpu_custom_call.1']
    #allocation4 [shape = 's32[1]{0}', space=sflag, size = 0x4, scoped, tag = 'scoped memory for tpu_custom_call.1']
    #allocation5 [shape = 'u8[2048]{0}', space=vmem, size = 0x800, scoped, tag = 'output window, operand 0, single buffered']
    #allocation6 [shape = 'u8[2048]{0}', space=vmem, size = 0x800, scoped, tag = 'output window, operand 1, single buffered']
    #allocation7 [shape = 's32[1]{0}', space=sflag, size = 0x4, scoped, tag = 'scoped memory for tpu_custom_call.1']
    %8 = vsyncpa [#allocation3], 0
    %9 = vsyncpa [#allocation4], 0
    %10 = vsyncpa [#allocation7], 0
    // Predicated region
    $region2: #{tpu_custom_call.1} parent=1 // pred_check
      _
    $region3: #{tpu_custom_call.1} parent=1 // pred_check_branch
      %12 = sbr.rel (0) target = $region5
    $region4: #{tpu_custom_call.1} parent=1 // pred_region
      %s14 = ssub.s32 64, 64
      %15 = vsyncadd [#allocation3], %s14
      %s17 = sshll.u32 [#allocation2], 4
      %s18 = int_to_ptr.vmem [resolvable:$true] %s17
      %20 = dma.hbm_to_vmem [thread:$0]  %s0, 64, %s18, [#allocation3]
    $region5: #{tpu_custom_call.1} parent=1 // pred_fallthru
      _
    // Predicated region
    $region6: #{tpu_custom_call.1} parent=1 // pred_check
      _
    $region7: #{tpu_custom_call.1} parent=1 // pred_check_branch
      %22 = sbr.rel (0) target = $region9
    $region8: #{tpu_custom_call.1} parent=1 // pred_region
      %23 = dma.done [#allocation3], 64
    $region9: #{tpu_custom_call.1} parent=1 // pred_fallthru
      _
    %v24 = vld [vmem:[#allocation2] sm:$0xf]
    %vm25 = vcmask 125952
    %26 = vst.msk [vmem:[#allocation5] sm:$0xf] %vm25, %v24
    %v27 = vld [vmem:[#allocation2] sm:$0xf]
    %29 = vrot.lane.b32.xlu0 %v27, 112
    %v30 = vpop.permute.xlu0 %29
    %vm32 = vcmask 60416
    %33 = vst.msk [vmem:[#allocation6] sm:$0xf] %vm32, %v30
    // Predicated region
    $region10: #{tpu_custom_call.1} parent=1 // pred_check
      _
    $region11: #{tpu_custom_call.1} parent=1 // pred_check_branch
      %35 = sbr.rel (0) target = $region13
    $region12: #{tpu_custom_call.1} parent=1 // pred_region
      %s37 = ssub.s32 64, 64
      %38 = vsyncadd [#allocation4], %s37
      %s40 = sshll.u32 [#allocation5], 4
      %s41 = int_to_ptr.vmem [resolvable:$true] %s40
      %43 = dma.vmem_to_hbm [thread:$0]  %s41, 64, %s1, [#allocation4]
    $region13: #{tpu_custom_call.1} parent=1 // pred_fallthru
      _
    // Predicated region
    $region14: #{tpu_custom_call.1} parent=1 // pred_check
      _
    $region15: #{tpu_custom_call.1} parent=1 // pred_check_branch
      %45 = sbr.rel (0) target = $region17
    $region16: #{tpu_custom_call.1} parent=1 // pred_region
      %s47 = ssub.s32 64, 64
      %48 = vsyncadd [#allocation7], %s47
      %s50 = sshll.u32 [#allocation6], 4
      %s51 = int_to_ptr.vmem [resolvable:$true] %s50
      %53 = dma.vmem_to_hbm [thread:$0]  %s51, 64, %s2, [#allocation7]
    $region17: #{tpu_custom_call.1} parent=1 // pred_fallthru
      _
    // Predicated region
    $region18: #{tpu_custom_call.1} parent=1 // pred_check
      _
    $region19: #{tpu_custom_call.1} parent=1 // pred_check_branch
      %55 = sbr.rel (0) target = $region21
    $region20: #{tpu_custom_call.1} parent=1 // pred_region
      %56 = dma.done [#allocation4], 64
    $region21: #{tpu_custom_call.1} parent=1 // pred_fallthru
      _
    // Predicated region
    $region22: #{tpu_custom_call.1} parent=1 // pred_check
      _
    $region23: #{tpu_custom_call.1} parent=1 // pred_check_branch
      %58 = sbr.rel (0) target = $region25
    $region24: #{tpu_custom_call.1} parent=1 // pred_region
      %59 = dma.done [#allocation7], 64
    $region25: #{tpu_custom_call.1} parent=1 // pred_fallthru
      _
    %60 = vsyncpa [#allocation3], 1
    %61 = vsyncpa [#allocation4], 1
    %62 = vsyncpa [#allocation7], 1

</llo_original>
